<compile_context>
chip_gen: v6e
topology: v6e:2x2x1
jax: 0.10.0
libtpu: 0.0.40
codegen_flags: <defaults>
</compile_context>

<pallas_src>
import functools

import jax
import jax.numpy as jnp
from jax import lax
from jax.experimental import pallas as pl
from jax.experimental.pallas import tpu as pltpu

_INT32_MIN = -(2 ** 31)
_RADIX_BITS = 2          # 2 bits / pass -> 16 serial passes over the f32 keys


def _round_up(n, m):
    return ((n + m - 1) // m) * m


def _index_bits(h):
    return max(1, (h - 1).bit_length())


def _single_buffered(block_shape, index_map):
    """BlockSpec that asks the pipeline for a single buffer (no double
    buffering) -- for grid-invariant / inner-axis-invariant operands so their
    VMEM residency is not doubled.  Falls back to a plain BlockSpec if this
    JAX build does not expose pipeline_mode."""
    buffered = getattr(pl, "Buffered", None)
    if buffered is not None:
        try:
            return pl.BlockSpec(block_shape, index_map,
                                pipeline_mode=buffered(buffer_count=1))
        except TypeError:
            pass
    return pl.BlockSpec(block_shape, index_map)


def _radix_select_kth_largest(keys, k, num_bits, init_prefix, radix_bits):
    """Exact per-row k-th largest value of int32 `keys` (rows, H).

    MSB->LSB construction of the answer, `radix_bits` bits per pass: per pass,
    count keys >= prefix + (d << p) for every nonzero digit d (the compares
    share one read of `keys` and co-issue on the VALU slots); counts are
    non-increasing in d, so the chosen digit is #{d : count_d >= k}.
    Cost: ceil(num_bits / radix_bits) serial passes, independent of k.
    `k` is a (rows, 1) int32 array (>= 1).  `init_prefix` is the lower bound
    of the key domain (_INT32_MIN for full-range float keys -- the int32
    wrap-around in the first pass is intended -- or 0 for non-negative index
    keys with -1 sentinels).
    """
    if init_prefix != 0:
        # The wrap-around trick in the first pass needs exact bit coverage.
        assert num_bits % radix_bits == 0
    rows = keys.shape[0]
    radix = 1 << radix_bits
    num_passes = (num_bits + radix_bits - 1) // radix_bits
    prefix0 = jnp.full((rows, 1), init_prefix, dtype=jnp.int32)

    def body(i, prefix):
        p = (jnp.int32(num_passes - 1) - i) * radix_bits    # low bit of digit
        digit = jnp.zeros((rows, 1), jnp.int32)
        for d in range(1, radix):                           # radix-1 counts / pass
            cand = prefix + (jnp.int32(d) << p)             # wrapping int32 on purpose
            cnt = jnp.sum((keys >= cand).astype(jnp.int32), axis=-1, keepdims=True)
            digit = digit + (cnt >= k).astype(jnp.int32)
        return prefix + (digit << p)

    return lax.fori_loop(0, num_passes, body, prefix0, unroll=True)


def _encoder_kernel(x_ref, wencT_ref, benc_ref, bdec_ref, hid_ref):
    # hidden[i, jtile] = (x_i - b_dec) @ W_encT[:, jtile] + b_enc[jtile]
    xc = (x_ref[...] - bdec_ref[...]).astype(jnp.bfloat16)
    hid_ref[...] = (
        jnp.dot(xc, wencT_ref[...], preferred_element_type=jnp.float32)
        + benc_ref[...])


def _select_decode_kernel(hid_ref, wdecT_ref, bdec_ref, recon_ref, sparse_ref,
                          thresh_ref, cut_ref, *, k_total, th, radix_bits):
    j = pl.program_id(1)
    tb, h_pad = hid_ref.shape

    @pl.when(j == 0)
    def _select():
        # Exact per-row top-(k_total) threshold over the full resident hidden
        # row block, computed once per batch tile.  Only the order-preserving
        # int32 key pattern is kept live across the select passes.
        bits = pltpu.bitcast(hid_ref[...], jnp.int32)
        keys = jnp.where(bits >= 0, bits, jnp.int32(_INT32_MIN) - bits)
        k_vec = jnp.full((tb, 1), k_total, jnp.int32)
        thr = _radix_select_kth_largest(keys, k_vec, 32, _INT32_MIN, radix_bits)
        thresh_ref[...] = thr

        eq = keys == thr
        n_gt = jnp.sum((keys > thr).astype(jnp.int32), axis=-1, keepdims=True)
        m_eq = jnp.sum(eq.astype(jnp.int32), axis=-1, keepdims=True)
        need = jnp.int32(k_total) - n_gt                 # >= 1 by construction
        # Default cut keeps every tied column (exact when m_eq == need).
        cut_ref[...] = jnp.full((tb, 1), h_pad - 1, jnp.int32)

        @pl.when(jnp.any(m_eq > need))                   # exact bit ties are rare
        def _tie_fixup():
            # Keep only the `need` leftmost tied columns (torch.topk tie rule):
            # need-th smallest tied index == (m_eq - need + 1)-th largest.
            col = lax.broadcasted_iota(jnp.int32, (tb, h_pad), 1)
            idx_keys = jnp.where(eq, col, jnp.int32(-1))
            cut_ref[...] = _radix_select_kth_largest(
                idx_keys, m_eq - need + 1, _index_bits(h_pad), 0, radix_bits)

        # Initialize the resident reconstruction block with the decoder bias.
        recon_ref[...] = jnp.broadcast_to(bdec_ref[...], recon_ref.shape)

    # ---- per H-tile: mask, sparse writeback, decoder accumulation ----------
    h_tile = hid_ref[:, pl.ds(pl.multiple_of(j * th, 128), th)]
    bits_t = pltpu.bitcast(h_tile, jnp.int32)
    keys_t = jnp.where(bits_t >= 0, bits_t, jnp.int32(_INT32_MIN) - bits_t)
    col_t = lax.broadcasted_iota(jnp.int32, (tb, th), 1) + j * th
    thr_v = thresh_ref[...]
    keep = (keys_t > thr_v) | ((keys_t == thr_v) & (col_t <= cut_ref[...]))
    sp = jnp.where(keep, h_tile, 0.0)
    sparse_ref[...] = sp.astype(sparse_ref.dtype)
    recon_ref[...] += jnp.dot(sp.astype(jnp.bfloat16), wdecT_ref[...],
                              preferred_element_type=jnp.float32)


def batch_topk_sae_forward(x, w_enc, b_enc, w_dec, b_dec, k, *,
                           block_b=128, block_h=1024,
                           sparse_dtype=jnp.float32):
    """BatchTopKSAE forward.

    x: (B, D).  w_enc: (H, D), b_enc: (H,), w_dec: (D, H), b_dec: (D,)
    (native torch.nn.Linear layouts).  Returns
    (reconstruction (B, D) f32, sparse_representation (B, H) sparse_dtype).
    """
    B, D = x.shape
    H = w_enc.shape[0]
    k_total = int(k) * B     # torch.topk(hidden, k * B) along dim=-1 (per row)
    assert 0 < k_total <= H, "torch.topk would fail: k * batch > hidden_dim"

    # ---- tile sizes from the per-core VMEM budget (64 MiB/TC on v7x) -------
    try:
        vmem_cap = int(pltpu.get_tpu_info().vmem_capacity_bytes)
    except Exception:                       # no TPU info available
        vmem_cap = 64 * 1024 * 1024
    sparse_bytes = jnp.dtype(sparse_dtype).itemsize

    def est(tb, th):                        # rough resident-set estimate (bytes)
        hp = _round_up(H, th)
        enc = (2 * tb * D * 4 + 2 * D * th * 2 + 2 * th * 4 + D * 4
               + 2 * tb * th * 4 + 2 * tb * th * 4)
        dec = (tb * hp * 4                  # resident hidden row block (1 buffer)
               + 3 * tb * hp * 4            # radix-select keys / mask temps
               + 2 * th * D * 2 + D * 4     # streamed W_decT tiles + b_dec
               + 2 * tb * D * 4             # recon output block
               + 2 * tb * th * sparse_bytes # sparse output block
               + 2 * tb * th * 4)           # per-tile temps
        return max(enc, dec)

    tb = max(16, min(_round_up(B, 16), _round_up(block_b, 16)))  # 16: bf16 packing
    th = max(128, min(_round_up(H, 128), _round_up(block_h, 128)))
    budget = int(0.6 * vmem_cap)
    while est(tb, th) > budget and tb > 16:        # v7x -> smaller batch tiles
        tb = max(16, _round_up(tb // 2, 16))
    while est(tb, th) > budget and th > 128:
        th = max(128, _round_up(th // 2, 128))
    vmem_limit = int(min(0.9 * vmem_cap,
                         max(64 << 20, 2 * est(tb, th) + (16 << 20))))

    b_pad = _round_up(B, tb)
    h_pad = _round_up(H, th)
    nb, nh = b_pad // tb, h_pad // th

    # ---- operand prep (one-time, HBM side) ---------------------------------
    x_f32 = jnp.asarray(x, jnp.float32)
    if b_pad != B:
        x_f32 = jnp.pad(x_f32, ((0, b_pad - B), (0, 0)))

    # Pre-transpose the bf16 weights ONCE so both in-kernel matmuls contract
    # with standard (lhs dim 1, rhs dim 0) dimension numbers -- no per-tile
    # transposes inside the kernels.  (With tied weights W_dec == W_enc.T the
    # two transposed operands are just each other's bf16 cast.)
    wencT = jnp.asarray(w_enc, jnp.bfloat16).T        # (D, H)
    wdecT = jnp.asarray(w_dec, jnp.bfloat16).T        # (H, D)
    benc = jnp.asarray(b_enc, jnp.float32).reshape(1, H)
    bdec = jnp.asarray(b_dec, jnp.float32).reshape(1, D)
    if h_pad != H:
        wencT = jnp.pad(wencT, ((0, 0), (0, h_pad - H)))
        wdecT = jnp.pad(wdecT, ((0, h_pad - H), (0, 0)))
        # -inf bias on padded hidden columns keeps them out of the top-k.
        benc = jnp.pad(benc, ((0, 0), (0, h_pad - H)), constant_values=-jnp.inf)

    cparams = dict(vmem_limit_bytes=vmem_limit)

    # ---- phase 1: encoder ---------------------------------------------------
    hidden = pl.pallas_call(
        _encoder_kernel,
        out_shape=jax.ShapeDtypeStruct((b_pad, h_pad), jnp.float32),
        grid=(nb, nh),
        in_specs=[
            pl.BlockSpec((tb, D), lambda i, j: (i, 0)),       # x rows
            pl.BlockSpec((D, th), lambda i, j: (0, j)),       # W_encT tile (streamed)
            pl.BlockSpec((1, th), lambda i, j: (0, j)),       # b_enc tile
            _single_buffered((1, D), lambda i, j: (0, 0)),    # b_dec (grid-invariant)
        ],
        out_specs=pl.BlockSpec((tb, th), lambda i, j: (i, j)),
        compiler_params=pltpu.CompilerParams(
            dimension_semantics=("parallel", "parallel"), **cparams),
    )(x_f32, wencT, benc, bdec)

    # ---- phase 2: batch top-k select + decoder ------------------------------
    kernel2 = functools.partial(_select_decode_kernel, k_total=k_total,
                                th=th, radix_bits=_RADIX_BITS)
    recon, sparse = pl.pallas_call(
        kernel2,
        out_shape=(
            jax.ShapeDtypeStruct((b_pad, D), jnp.float32),        # reconstruction
            jax.ShapeDtypeStruct((b_pad, h_pad), sparse_dtype),   # sparse codes
        ),
        grid=(nb, nh),
        in_specs=[
            _single_buffered((tb, h_pad), lambda i, j: (i, 0)),   # hidden row block
            pl.BlockSpec((th, D), lambda i, j: (j, 0)),           # W_decT tile (streamed)
            _single_buffered((1, D), lambda i, j: (0, 0)),        # b_dec (grid-invariant)
        ],
        out_specs=(
            pl.BlockSpec((tb, D), lambda i, j: (i, 0)),           # recon (accumulated)
            pl.BlockSpec((tb, th), lambda i, j: (i, j)),          # sparse tile
        ),
        scratch_shapes=[
            pltpu.VMEM((tb, 1), jnp.int32),      # per-row threshold key
            pltpu.VMEM((tb, 1), jnp.int32),      # per-row tie cut-off column
        ],
        compiler_params=pltpu.CompilerParams(
            dimension_semantics=("parallel", "arbitrary"), **cparams),
    )(hidden, wdecT, bdec)

    return recon[:B], sparse[:B, :H]


def _reference_forward(x, w_enc, b_enc, w_dec, b_dec, k):
    """Pure-JAX mirror of BatchTopKSAE.forward.  Matmuls use bf16 operands
    with f32 accumulation to match the kernel's bf16 weight streaming."""
    xc = (x - b_dec).astype(jnp.bfloat16)
    hidden = jnp.dot(xc, w_enc.astype(jnp.bfloat16).T,
                     preferred_element_type=jnp.float32) + b_enc
    k_total = k * x.shape[0]
    vals, idx = lax.top_k(hidden, k_total)
    sparse = jax.vmap(lambda s, i, v: s.at[i].set(v))(
        jnp.zeros_like(hidden), idx, vals)
    recon = jnp.dot(sparse.astype(jnp.bfloat16), w_dec.astype(jnp.bfloat16).T,
                    preferred_element_type=jnp.float32) + b_dec
    return recon, sparse


if __name__ == "__main__":
    # Small but lane/sublane-aligned shapes: D and H multiples of 128.
    B, input_dim, hidden_dim, k = 2, 128, 256, 4       # k * B = 8 <= hidden_dim

    key = jax.random.PRNGKey(0)
    kx, kw, kbe, kbd = jax.random.split(key, 4)

    x = jax.random.normal(kx, (B, input_dim), jnp.float32)
    # Parameter shapes mirror the module __init__:
    #   encoder: Linear(input_dim, hidden_dim) -> W_enc (H, D), b_enc (H,)
    #   decoder: Linear(hidden_dim, input_dim) -> W_dec (D, H) = W_enc.T, b_dec (D,)
    w_enc = jax.random.normal(kw, (hidden_dim, input_dim), jnp.float32) * 0.1
    b_enc = jax.random.normal(kbe, (hidden_dim,), jnp.float32) * 0.1
    w_dec = w_enc.T                                    # mirrors .copy_(weight.t())
    b_dec = jax.random.normal(kbd, (input_dim,), jnp.float32) * 0.1

    recon, sparse = batch_topk_sae_forward(x, w_enc, b_enc, w_dec, b_dec, k)
    jax.block_until_ready((recon, sparse))

    ref_recon, ref_sparse = _reference_forward(x, w_enc, b_enc, w_dec, b_dec, k)
    assert sparse.shape == (B, hidden_dim) and recon.shape == (B, input_dim)
    assert int(jnp.count_nonzero(sparse)) == k * B * B   # k*B activations per row
    assert jnp.allclose(sparse, ref_sparse, atol=1e-4, rtol=1e-4)
    assert jnp.allclose(recon, ref_recon, atol=1e-4, rtol=1e-4)

    print("KERNEL_OK")
</pallas_src>

<mosaic_0001>
module attributes {stable_mosaic.version = 11 : i64} {
  func.func @_encoder_kernel(%arg0: i32, %arg1: i32, %arg2: memref<16x128xf32, #tpu.memory_space<vmem>>, %arg3: memref<128x256xbf16, #tpu.memory_space<vmem>>, %arg4: memref<1x256xf32, #tpu.memory_space<vmem>>, %arg5: memref<1x128xf32, #tpu.memory_space<vmem>>, %arg6: memref<16x256xf32, #tpu.memory_space<vmem>>) attributes {dimension_semantics = [#tpu.dimension_semantics<parallel>, #tpu.dimension_semantics<parallel>], iteration_bounds = array<i64: 1, 1>, scalar_prefetch = 0 : i64, scratch_operands = 0 : i64, tpu.core_type = #tpu.core_type<tc>, window_params = [{transform_indices = @transform_0, window_bounds = array<i64: 16, 128>}, {transform_indices = @transform_1, window_bounds = array<i64: 128, 256>}, {transform_indices = @transform_2, window_bounds = array<i64: 1, 256>}, {pipeline_mode = #tpu.pipeline_mode<synchronous>, transform_indices = @transform_3, window_bounds = array<i64: 1, 128>}, {transform_indices = @transform_4, window_bounds = array<i64: 16, 256>}]} {
    %c0 = arith.constant 0 : index
    %c0_0 = arith.constant 0 : index
    %0 = vector.load %arg2[%c0, %c0_0] : memref<16x128xf32, #tpu.memory_space<vmem>>, vector<16x128xf32>
    %c0_1 = arith.constant 0 : index
    %c0_2 = arith.constant 0 : index
    %1 = vector.load %arg5[%c0_1, %c0_2] : memref<1x128xf32, #tpu.memory_space<vmem>>, vector<1x128xf32>
    %2 = vector.broadcast %1 : vector<1x128xf32> to vector<16x128xf32>
    %3 = arith.subf %0, %2 : vector<16x128xf32>
    %4 = arith.truncf %3 : vector<16x128xf32> to vector<16x128xbf16>
    %c0_3 = arith.constant 0 : index
    %c0_4 = arith.constant 0 : index
    %5 = vector.load %arg3[%c0_3, %c0_4] : memref<128x256xbf16, #tpu.memory_space<vmem>>, vector<128x256xbf16>
    %cst = arith.constant dense<0.000000e+00> : vector<16x256xf32>
    %6 = tpu.matmul %4, %5, %cst {dimension_numbers = #tpu.dot_dimension_numbers<[1], [0], [0], [1], [0, 0, 1, 1], [], []>} : vector<16x128xbf16>, vector<128x256xbf16>, vector<16x256xf32> -> vector<16x256xf32>
    %c0_5 = arith.constant 0 : index
    %c0_6 = arith.constant 0 : index
    %7 = vector.load %arg4[%c0_5, %c0_6] : memref<1x256xf32, #tpu.memory_space<vmem>>, vector<1x256xf32>
    %8 = vector.broadcast %7 : vector<1x256xf32> to vector<16x256xf32>
    %9 = arith.addf %6, %8 : vector<16x256xf32>
    %c0_7 = arith.constant 0 : index
    %c0_8 = arith.constant 0 : index
    %10 = vector.load %arg6[%c0_7, %c0_8] : memref<16x256xf32, #tpu.memory_space<vmem>>, vector<16x256xf32>
    tpu.vector_store %arg6[%c0_7, %c0_8], %9 {strides = array<i32>} : memref<16x256xf32, #tpu.memory_space<vmem>>, vector<16x256xf32>,
    return
  }
  func.func @transform_0(%arg0: i32, %arg1: i32) -> (i32, i32) {
    %c0_i32 = arith.constant 0 : i32
    %c0_i32_0 = arith.constant 0 : i32
    return %arg0, %c0_i32 : i32, i32
  }
  func.func @transform_1(%arg0: i32, %arg1: i32) -> (i32, i32) {
    %c0_i32 = arith.constant 0 : i32
    %c0_i32_0 = arith.constant 0 : i32
    return %c0_i32, %arg1 : i32, i32
  }
  func.func @transform_2(%arg0: i32, %arg1: i32) -> (i32, i32) {
    %c0_i32 = arith.constant 0 : i32
    %c0_i32_0 = arith.constant 0 : i32
    return %c0_i32, %arg1 : i32, i32
  }
  func.func @transform_3(%arg0: i32, %arg1: i32) -> (i32, i32) {
    %c0_i32 = arith.constant 0 : i32
    %c0_i32_0 = arith.constant 0 : i32
    %c0_i32_1 = arith.constant 0 : i32
    return %c0_i32, %c0_i32_0 : i32, i32
  }
  func.func @transform_4(%arg0: i32, %arg1: i32) -> (i32, i32) {
    %c0_i32 = arith.constant 0 : i32
    return %arg0, %arg1 : i32, i32
  }
}

</mosaic_0001>

<llo_original>
// kernel: tpu_custom_call.1
$region0: #{tpu_custom_call.1}
  #allocation0 [shape = 'u32[]', space=smem, size = 0x4, offset = 0x4, fixed_abs, tag = 'smem constant byte address 0x4 - core index']
  #allocation1 [shape = 'u32[144,128]{1,0:T(1,128)}', space=vmem, size = 0x12000, scoped, tag = 'internal scratch']
  %s0 = inlined_call_operand.hbm [shape: f32[16,128], index: 0, kind: input, shape index: {}]
  %s1 = inlined_call_operand.hbm [shape: bf16[128,256], index: 1, kind: input, shape index: {}]
  %s2 = inlined_call_operand.vmem [shape: f32[1,256], index: 2, kind: input, shape index: {}]
  %s3 = inlined_call_operand.vmem [shape: f32[1,128], index: 3, kind: input, shape index: {}]
  %s4 = inlined_call_operand.hbm [shape: f32[16,256], index: 4, kind: output, shape index: {}]
  %s5 = sld [smem:[#allocation0]]
  $region34: #{tpu_custom_call.1} parent=0
    _
  %s7 = ssub.s32 1, %s5
  %s8 = scalar_select 0, %s7, %s5
  $region1: #{tpu_custom_call.1} parent=0
    #allocation2 [shape = 'u8[8192]{0}', space=vmem, size = 0x2000, scoped, tag = 'input window, operand 0, single buffered']
    #allocation3 [shape = 's32[1]{0}', space=sflag, size = 0x4, scoped, tag = 'scoped memory for tpu_custom_call.1']
    #allocation4 [shape = 's32[1]{0}', space=sflag, size = 0x4, scoped, tag = 'scoped memory for tpu_custom_call.1']
    #allocation5 [shape = 'u8[65536]{0}', space=vmem, size = 0x10000, scoped, tag = 'input window, operand 1, single buffered']
    #allocation6 [shape = 's32[1]{0}', space=sflag, size = 0x4, scoped, tag = 'scoped memory for tpu_custom_call.1']
    #allocation7 [shape = 'u8[16384]{0}', space=vmem, size = 0x4000, scoped, tag = 'output window, operand 0, single buffered']
    %9 = vsyncpa [#allocation3], 0
    %10 = vsyncpa [#allocation6], 0
    %11 = vsyncpa [#allocation4], 0
    // Predicated region
    $region2: #{tpu_custom_call.1} parent=1 // pred_check
      _
    $region3: #{tpu_custom_call.1} parent=1 // pred_check_branch
      %13 = sbr.rel (0) target = $region5
    $region4: #{tpu_custom_call.1} parent=1 // pred_region
      %s15 = ssub.s32 256, 256
      %16 = vsyncadd [#allocation3], %s15
      %s17 = sshll.u32 [#allocation2], 4
      %s18 = int_to_ptr.vmem [resolvable:$true] %s17
      %23 = dma.hbm_to_vmem [thread:$0]  %s0, 256, %s18, [#allocation3], 128, 128, 8
    $region5: #{tpu_custom_call.1} parent=1 // pred_fallthru
      _
    // Predicated region
    $region6: #{tpu_custom_call.1} parent=1 // pred_check
      _
    $region7: #{tpu_custom_call.1} parent=1 // pred_check_branch
      %25 = sbr.rel (0) target = $region9
    $region8: #{tpu_custom_call.1} parent=1 // pred_region
      %s27 = ssub.s32 2048, 2048
      %28 = vsyncadd [#allocation6], %s27
      %s29 = sshll.u32 [#allocation5], 4
      %s30 = int_to_ptr.vmem [resolvable:$true] %s29
      %35 = dma.hbm_to_vmem [thread:$0]  %s1, 2048, %s30, [#allocation6], 128, 128, 8
    $region9: #{tpu_custom_call.1} parent=1 // pred_fallthru
      _
    // Predicated region
    $region10: #{tpu_custom_call.1} parent=1 // pred_check
      _
    $region11: #{tpu_custom_call.1} parent=1 // pred_check_branch
      %37 = sbr.rel (0) target = $region13
    $region12: #{tpu_custom_call.1} parent=1 // pred_region
      _
    $region13: #{tpu_custom_call.1} parent=1 // pred_fallthru
      _
    // Predicated region
    $region14: #{tpu_custom_call.1} parent=1 // pred_check
      _
    $region15: #{tpu_custom_call.1} parent=1 // pred_check_branch
      %39 = sbr.rel (0) target = $region17
    $region16: #{tpu_custom_call.1} parent=1 // pred_region
      _
    $region17: #{tpu_custom_call.1} parent=1 // pred_fallthru
      _
    // Predicated region
    $region18: #{tpu_custom_call.1} parent=1 // pred_check
      _
    $region19: #{tpu_custom_call.1} parent=1 // pred_check_branch
      %41 = sbr.rel (0) target = $region21
    $region20: #{tpu_custom_call.1} parent=1 // pred_region
      %42 = dma.done [#allocation3], 256
    $region21: #{tpu_custom_call.1} parent=1 // pred_fallthru
      _
    // Predicated region
    $region22: #{tpu_custom_call.1} parent=1 // pred_check
      _
    $region23: #{tpu_custom_call.1} parent=1 // pred_check_branch
      %44 = sbr.rel (0) target = $region25
    $region24: #{tpu_custom_call.1} parent=1 // pred_region
      %45 = dma.done [#allocation6], 2048
    $region25: #{tpu_custom_call.1} parent=1 // pred_fallthru
      _
    %v47 = vld [vmem:[#allocation2] sm:$0xff]
    %v48 = vld [vmem:[#allocation2 + $0x8] sm:$0xff]
    %v49 = vld [vmem:[%s3] sm:$0x1]
    %v51 = vlaneseq
    %v52 = vshrl.u32 %v51, 7
    %v53 = vsub.s32 0, %v52
    %v54 = vrot.slane %v49, %v53
    %v56 = vsub.f32 %v47, %v54
    %v57 = vsub.f32 %v48, %v54
    %v58 = vpack.c.bf16 %v57, %v56
    %v59 = vld [vmem:[#allocation5] sm:$0xff]
    %v60 = vld [vmem:[#allocation5 + $0x8] sm:$0xff]
    %v61 = vld [vmem:[#allocation5 + $0x10] sm:$0xff]
    %v62 = vld [vmem:[#allocation5 + $0x18] sm:$0xff]
    %v63 = vld [vmem:[#allocation5 + $0x20] sm:$0xff]
    %v64 = vld [vmem:[#allocation5 + $0x28] sm:$0xff]
    %v65 = vld [vmem:[#allocation5 + $0x30] sm:$0xff]
    %v66 = vld [vmem:[#allocation5 + $0x38] sm:$0xff]
    %v67 = vld [vmem:[#allocation5 + $0x40] sm:$0xff]
    %v68 = vld [vmem:[#allocation5 + $0x48] sm:$0xff]
    %v69 = vld [vmem:[#allocation5 + $0x50] sm:$0xff]
    %v70 = vld [vmem:[#allocation5 + $0x58] sm:$0xff]
    %v71 = vld [vmem:[#allocation5 + $0x60] sm:$0xff]
    %v72 = vld [vmem:[#allocation5 + $0x68] sm:$0xff]
    %v73 = vld [vmem:[#allocation5 + $0x70] sm:$0xff]
    %v74 = vld [vmem:[#allocation5 + $0x78] sm:$0xff]
    %v75 = vld [vmem:[%s2] sm:$0x3]
    %v77 = vlaneseq
    %v78 = vshrl.u32 %v77, 7
    %v79 = vsub.s32 0, %v78
    %v80 = vrot.slane %v75, %v79
    %v81 = vlaneseq
    %v82 = vshrl.u32 %v81, 7
    %v83 = vsub.s32 1, %v82
    %v84 = vrot.slane %v75, %v83
    %v103 = vunpack.c.l.b16 %v59
    %v104 = vunpack.c.h.b16 %v59
    %v105 = vunpack.c.l.b16 %v60
    %v106 = vunpack.c.h.b16 %v60
    %v107 = vunpack.c.l.b16 %v61
    %v108 = vunpack.c.h.b16 %v61
    %v109 = vunpack.c.l.b16 %v62
    %v110 = vunpack.c.h.b16 %v62
    %v111 = vunpack.c.l.b16 %v63
    %v112 = vunpack.c.h.b16 %v63
    %v113 = vunpack.c.l.b16 %v64
    %v114 = vunpack.c.h.b16 %v64
    %v115 = vunpack.c.l.b16 %v65
    %v116 = vunpack.c.h.b16 %v65
    %v117 = vunpack.c.l.b16 %v66
    %v118 = vunpack.c.h.b16 %v66
    %v119 = vunpack.c.l.b16 %v67
    %v120 = vunpack.c.h.b16 %v67
    %v121 = vunpack.c.l.b16 %v68
    %v122 = vunpack.c.h.b16 %v68
    %v123 = vunpack.c.l.b16 %v69
    %v124 = vunpack.c.h.b16 %v69
    %v125 = vunpack.c.l.b16 %v70
    %v126 = vunpack.c.h.b16 %v70
    %v127 = vunpack.c.l.b16 %v71
    %v128 = vunpack.c.h.b16 %v71
    %v129 = vunpack.c.l.b16 %v72
    %v130 = vunpack.c.h.b16 %v72
    %v131 = vunpack.c.l.b16 %v73
    %v132 = vunpack.c.h.b16 %v73
    %v133 = vunpack.c.l.b16 %v74
    %v134 = vunpack.c.h.b16 %v74
    %v135 = vpack.c.b16 %v105, %v103
    %v136 = vpack.c.b16 %v106, %v104
    %v137 = vpack.c.b16 %v109, %v107
    %v138 = vpack.c.b16 %v110, %v108
    %v139 = vpack.c.b16 %v113, %v111
    %v140 = vpack.c.b16 %v114, %v112
    %v141 = vpack.c.b16 %v117, %v115
    %v142 = vpack.c.b16 %v118, %v116
    %v143 = vpack.c.b16 %v121, %v119
    %v144 = vpack.c.b16 %v122, %v120
    %v145 = vpack.c.b16 %v125, %v123
    %v146 = vpack.c.b16 %v126, %v124
    %v147 = vpack.c.b16 %v129, %v127
    %v148 = vpack.c.b16 %v130, %v128
    %v149 = vpack.c.b16 %v133, %v131
    %v150 = vpack.c.b16 %v134, %v132
    %167 = vmatprep.subr.bf16.mxu0 %v150
    %168 = vmatpush1.bf16.msra.mxu0 %v149
    %169 = vmatprep.subr.bf16.mxu0 %v148
    %170 = vmatpush1.bf16.msra.mxu0 %v147
    %171 = vmatprep.subr.bf16.mxu0 %v146
    %172 = vmatpush1.bf16.msra.mxu0 %v145
    %173 = vmatprep.subr.bf16.mxu0 %v144
    %174 = vmatpush1.bf16.msra.mxu0 %v143
    %175 = vmatprep.subr.bf16.mxu0 %v142
    %176 = vmatpush1.bf16.msra.mxu0 %v141
    %177 = vmatprep.subr.bf16.mxu0 %v140
    %178 = vmatpush1.bf16.msra.mxu0 %v139
    %179 = vmatprep.subr.bf16.mxu0 %v138
    %180 = vmatpush1.bf16.msra.mxu0 %v137
    %181 = vmatprep.subr.bf16.mxu0 %v136
    %182 = vmatpush1.bf16.msra.mxu0 %v135
    %183 = vmatprep.subr.bf16.mxu0 0
    %184 = vmatpush2.bf16.msra.mxu0 0
    %185 = vmatprep.subr.bf16.mxu0 0
    %186 = vmatpush2.bf16.msra.mxu0 0
    %187 = vmatprep.subr.bf16.mxu0 0
    %188 = vmatpush2.bf16.msra.mxu0 0
    %189 = vmatprep.subr.bf16.mxu0 0
    %190 = vmatpush2.bf16.msra.mxu0 0
    %191 = vmatprep.subr.bf16.mxu0 0
    %192 = vmatpush2.bf16.msra.mxu0 0
    %193 = vmatprep.subr.bf16.mxu0 0
    %194 = vmatpush2.bf16.msra.mxu0 0
    %195 = vmatprep.subr.bf16.mxu0 0
    %196 = vmatpush2.bf16.msra.mxu0 0
    %197 = vmatprep.subr.bf16.mxu0 0
    %198 = vmatpush2.bf16.msra.mxu0 0
    %199 = vmatprep.mubr.bf16.mxu0 0
    %200 = vmatmul.mubr.bf16.gmra.mxu0 %v58
    %v201 = vpop.f32.mrf.mxu0
    %v202 = vadd.f32 %v80, %v201
    %v203 = vpop.f32.mrf.mxu0
    %v204 = vadd.f32 %v84, %v203
    %v205 = vpop.f32.mrf.mxu0
    %v206 = vadd.f32 %v80, %v205
    %v207 = vpop.f32.mrf.mxu0
    %v208 = vadd.f32 %v84, %v207
    %209 = vdwg.mxu0
    %210 = vst [vmem:[#allocation7] sm:$0xff] %v202
    %211 = vst [vmem:[#allocation7 + $0x8] sm:$0xff] %v204
    %212 = vst [vmem:[#allocation7 + $0x10] sm:$0xff] %v206
    %213 = vst [vmem:[#allocation7 + $0x18] sm:$0xff] %v208
    // Predicated region
    $region26: #{tpu_custom_call.1} parent=1 // pred_check
      _
    $region27: #{tpu_custom_call.1} parent=1 // pred_check_branch
      %215 = sbr.rel (0) target = $region29
    $region28: #{tpu_custom_call.1} parent=1 // pred_region
      %s217 = ssub.s32 512, 512
      %218 = vsyncadd [#allocation4], %s217
      %s219 = sshll.u32 [#allocation7], 4
      %s220 = int_to_ptr.vmem [resolvable:$true] %s219
      %225 = dma.vmem_to_hbm [thread:$0]  %s220, 512, %s4, [#allocation4], 256, 256, 16
    $region29: #{tpu_custom_call.1} parent=1 // pred_fallthru
      _
    // Predicated region
    $region30: #{tpu_custom_call.1} parent=1 // pred_check
      _
    $region31: #{tpu_custom_call.1} parent=1 // pred_check_branch
      %227 = sbr.rel (0) target = $region33
    $region32: #{tpu_custom_call.1} parent=1 // pred_region
      %228 = dma.done [#allocation4], 512
    $region33: #{tpu_custom_call.1} parent=1 // pred_fallthru
      _
    %229 = vsyncpa [#allocation3], 1
    %230 = vsyncpa [#allocation6], 1
    %231 = vsyncpa [#allocation4], 1

</llo_original>
